<compile_context>
chip_gen: v7x
topology: tpu7x:2x2x1
jax: 0.10.0
libtpu: 0.0.40
codegen_flags: <defaults>
</compile_context>

<pallas_src>
import functools

import jax
import jax.numpy as jnp
from jax.experimental import pallas as pl
from jax.experimental.pallas import tpu as pltpu


def _round_up(x, m):
    return ((x + m - 1) // m) * m


def _apply_act(x, act):
    if act == "ReLU":
        return jnp.maximum(x, 0.0)
    if act == "GELU":
        # Match torch.nn.GELU default (exact erf form, not tanh approximation).
        return jax.nn.gelu(x, approximate=False)
    if act == "Tanh":
        return jnp.tanh(x)
    if act == "Sigmoid":
        return jax.nn.sigmoid(x)
    if act == "Identity":
        return x
    raise NotImplementedError(f"act={act}")


def _interact_kernel(xu_ref, xv_ref, wu_ref, wv_ref, b_ref, o_ref, *, act):
    # xu/xv: (tb, E)   wu/wv: (E, I)   b: (1, I)   o: (tb, I)
    acc = jnp.dot(xu_ref[...], wu_ref[...], preferred_element_type=jnp.float32)
    acc = acc + jnp.dot(xv_ref[...], wv_ref[...], preferred_element_type=jnp.float32)
    acc = acc + b_ref[...].astype(jnp.float32)
    acc = _apply_act(acc, act)              # epilogue in f32, cast only at the store
    o_ref[...] = acc.astype(o_ref.dtype)


def prepare_interact_params(wu, bu, wv, bv, param_dtype=None):
    """One-time parameter prep (hoisted out of the per-call path).

    wu, wv: [inter_dim, emb_dim] (PyTorch nn.Linear layout); bu, bv: [inter_dim].
    Returns (wu_t, wv_t, b):
      wu_t, wv_t: [emb_dim, inter_dim]  (transposed, unpadded)
      b:          [1, inter_dim]        (pre-summed bu + bv)
    param_dtype: optional cast (e.g. jnp.bfloat16 on v6e/v7x halves weight HBM
    bytes; accumulation stays f32).  Default None keeps the given dtype.
    """
    wu_t = wu.T
    wv_t = wv.T
    b = (bu + bv).reshape(1, -1)
    if param_dtype is not None:
        wu_t = wu_t.astype(param_dtype)
        wv_t = wv_t.astype(param_dtype)
        b = b.astype(param_dtype)
    return wu_t, wv_t, b


def _vmem_capacity_bytes():
    try:
        return int(pltpu.get_tpu_info().vmem_capacity_bytes)
    except Exception:
        return 64 * 1024 * 1024   # conservative: v7x per-TensorCore VMEM


def _pick_block_rows(n, e, i, in_itemsize, out_itemsize, w_itemsize, budget):
    # Conservative: assume params end up double-buffered even though their
    # constant index_map normally keeps a single resident copy.
    resident = 2 * (2 * e * i + i) * w_itemsize
    # Double-buffered activation tiles (emb_u + emb_v) and output tile.
    per_row = 2 * (2 * e * in_itemsize + i * out_itemsize)
    tb = (budget - resident) // max(per_row, 1)
    # Large tiles amortize ~0.35 us per-grid-step overhead; sweep 512-2048 if desired.
    tb = int(max(8, min(tb, 1024)))
    tb = (tb // 8) * 8
    return max(8, min(tb, _round_up(n, 8)))


def interact_forward(emb_u, emb_v, wu_t, wv_t, b, *, act="ReLU", block_rows=None):
    """emb_u, emb_v: [N, emb_dim]; (wu_t, wv_t, b) from prepare_interact_params."""
    n, e = emb_u.shape
    e_w, inter_dim = wu_t.shape
    assert e_w == e and wv_t.shape == (e, inter_dim) and b.shape == (1, inter_dim)
    out_dtype = emb_u.dtype

    in_itemsize = jnp.dtype(emb_u.dtype).itemsize
    w_itemsize = jnp.dtype(wu_t.dtype).itemsize
    out_itemsize = jnp.dtype(out_dtype).itemsize

    # Generation-aware scoped VMEM: v7x (64 MiB/TC) -> 40 MiB; v5e/v6e (128 MiB)
    # -> 64 MiB.  Leaves headroom for compiler internal scratch.
    vmem_cap = _vmem_capacity_bytes()
    vmem_limit = int(min(vmem_cap * 5 // 8, 64 * 1024 * 1024))

    if block_rows is None:
        tb = _pick_block_rows(n, e, inter_dim, in_itemsize, out_itemsize,
                              w_itemsize, int(vmem_limit * 0.7))
    else:
        tb = max(8, (int(block_rows) // 8) * 8)

    # Ragged last block: no row padding needed.  OOB rows in the last block are
    # read (unspecified values) but outputs are row-independent and OOB writes
    # are discarded, so the visible result is exact.
    grid = (pl.cdiv(n, tb),)

    cost = pl.CostEstimate(
        flops=int(2 * n * (2 * e) * inter_dim + 2 * n * inter_dim),
        transcendentals=int(n * inter_dim) if act in ("GELU", "Tanh", "Sigmoid") else 0,
        bytes_accessed=int(n * 2 * e * in_itemsize
                           + (2 * e * inter_dim + inter_dim) * w_itemsize
                           + n * inter_dim * out_itemsize),
    )

    kernel = functools.partial(_interact_kernel, act=act)

    # NOTE: if inter_dim grows large enough that the (E x I) weights (counted
    # twice on v7x when sharded across both TCs) plus a (tb x I) output tile
    # pressure the 64 MiB/TC VMEM, add a second "parallel" grid axis over I
    # with (E, ti) weight blocks; not needed at these sizes.
    out = pl.pallas_call(
        kernel,
        out_shape=jax.ShapeDtypeStruct((n, inter_dim), out_dtype),
        grid_spec=pltpu.PrefetchScalarGridSpec(
            num_scalar_prefetch=0,
            grid=grid,
            in_specs=[
                pl.BlockSpec((tb, e), lambda i: (i, 0)),          # emb_u row tile
                pl.BlockSpec((tb, e), lambda i: (i, 0)),          # emb_v row tile
                pl.BlockSpec((e, inter_dim), lambda i: (0, 0)),   # Wu^T (resident)
                pl.BlockSpec((e, inter_dim), lambda i: (0, 0)),   # Wv^T (resident)
                pl.BlockSpec((1, inter_dim), lambda i: (0, 0)),   # bu+bv (resident)
            ],
            out_specs=pl.BlockSpec((tb, inter_dim), lambda i: (i, 0)),
        ),
        compiler_params=pltpu.CompilerParams(
            dimension_semantics=("parallel",),
            vmem_limit_bytes=vmem_limit,
        ),
        cost_estimate=cost,
    )(emb_u, emb_v, wu_t, wv_t, b)
    return out


if __name__ == "__main__":
    cfg = {"emb_dim": 32, "inter_dim": 64, "act": "ReLU"}
    batch = 8

    key = jax.random.PRNGKey(0)
    k_u, k_v, k_wu, k_bu, k_wv, k_bv = jax.random.split(key, 6)

    # Deterministic parameter init (mimics nn.Linear's uniform(-1/sqrt(fan_in), ...)).
    bound = 1.0 / (cfg["emb_dim"] ** 0.5)
    wu = jax.random.uniform(k_wu, (cfg["inter_dim"], cfg["emb_dim"]),
                            jnp.float32, -bound, bound)
    bu = jax.random.uniform(k_bu, (cfg["inter_dim"],), jnp.float32, -bound, bound)
    wv = jax.random.uniform(k_wv, (cfg["inter_dim"], cfg["emb_dim"]),
                            jnp.float32, -bound, bound)
    bv = jax.random.uniform(k_bv, (cfg["inter_dim"],), jnp.float32, -bound, bound)

    emb_u = jax.random.normal(k_u, (batch, cfg["emb_dim"]), jnp.float32)
    emb_v = jax.random.normal(k_v, (batch, cfg["emb_dim"]), jnp.float32)

    # One-time parameter prep (transpose weights, pre-sum bias).
    # For v6e/v7x deployments that tolerate it, pass param_dtype=jnp.bfloat16.
    wu_t, wv_t, b = prepare_interact_params(wu, bu, wv, bv)

    out = interact_forward(emb_u, emb_v, wu_t, wv_t, b, act=cfg["act"])
    out = jax.block_until_ready(out)

    # Pure-JAX reference check.
    ref = jnp.maximum(emb_u @ wu.T + bu + emb_v @ wv.T + bv, 0.0)
    assert out.shape == (batch, cfg["inter_dim"])
    assert jnp.allclose(out, ref, atol=1e-4, rtol=1e-5), float(jnp.max(jnp.abs(out - ref)))

    print("KERNEL_OK")
</pallas_src>

<mosaic_0001>
module attributes {stable_mosaic.version = 11 : i64} {
  func.func @_interact_kernel(%arg0: i32, %arg1: memref<8x32xf32, #tpu.memory_space<vmem>>, %arg2: memref<8x32xf32, #tpu.memory_space<vmem>>, %arg3: memref<32x64xf32, #tpu.memory_space<vmem>>, %arg4: memref<32x64xf32, #tpu.memory_space<vmem>>, %arg5: memref<1x64xf32, #tpu.memory_space<vmem>>, %arg6: memref<8x64xf32, #tpu.memory_space<vmem>>) attributes {dimension_semantics = [#tpu.dimension_semantics<parallel>], iteration_bounds = array<i64: 1>, scalar_prefetch = 0 : i64, scratch_operands = 0 : i64, tpu.core_type = #tpu.core_type<tc>, window_params = [{transform_indices = @transform_0, window_bounds = array<i64: 8, 32>}, {transform_indices = @transform_1, window_bounds = array<i64: 8, 32>}, {pipeline_mode = #tpu.pipeline_mode<synchronous>, transform_indices = @transform_2, window_bounds = array<i64: 32, 64>}, {pipeline_mode = #tpu.pipeline_mode<synchronous>, transform_indices = @transform_3, window_bounds = array<i64: 32, 64>}, {pipeline_mode = #tpu.pipeline_mode<synchronous>, transform_indices = @transform_4, window_bounds = array<i64: 1, 64>}, {transform_indices = @transform_5, window_bounds = array<i64: 8, 64>}]} {
    %c0 = arith.constant 0 : index
    %c0_0 = arith.constant 0 : index
    %0 = vector.load %arg1[%c0, %c0_0] : memref<8x32xf32, #tpu.memory_space<vmem>>, vector<8x32xf32>
    %c0_1 = arith.constant 0 : index
    %c0_2 = arith.constant 0 : index
    %1 = vector.load %arg3[%c0_1, %c0_2] : memref<32x64xf32, #tpu.memory_space<vmem>>, vector<32x64xf32>
    %cst = arith.constant dense<0.000000e+00> : vector<8x64xf32>
    %2 = tpu.matmul %0, %1, %cst {dimension_numbers = #tpu.dot_dimension_numbers<[1], [0], [0], [1], [0, 0, 1, 1], [], []>} : vector<8x32xf32>, vector<32x64xf32>, vector<8x64xf32> -> vector<8x64xf32>
    %c0_3 = arith.constant 0 : index
    %c0_4 = arith.constant 0 : index
    %3 = vector.load %arg2[%c0_3, %c0_4] : memref<8x32xf32, #tpu.memory_space<vmem>>, vector<8x32xf32>
    %c0_5 = arith.constant 0 : index
    %c0_6 = arith.constant 0 : index
    %4 = vector.load %arg4[%c0_5, %c0_6] : memref<32x64xf32, #tpu.memory_space<vmem>>, vector<32x64xf32>
    %cst_7 = arith.constant dense<0.000000e+00> : vector<8x64xf32>
    %5 = tpu.matmul %3, %4, %cst_7 {dimension_numbers = #tpu.dot_dimension_numbers<[1], [0], [0], [1], [0, 0, 1, 1], [], []>} : vector<8x32xf32>, vector<32x64xf32>, vector<8x64xf32> -> vector<8x64xf32>
    %6 = arith.addf %2, %5 : vector<8x64xf32>
    %c0_8 = arith.constant 0 : index
    %c0_9 = arith.constant 0 : index
    %7 = vector.load %arg5[%c0_8, %c0_9] : memref<1x64xf32, #tpu.memory_space<vmem>>, vector<1x64xf32>
    %8 = vector.broadcast %7 : vector<1x64xf32> to vector<8x64xf32>
    %9 = arith.addf %6, %8 : vector<8x64xf32>
    %cst_10 = arith.constant 0.000000e+00 : f32
    %10 = vector.broadcast %cst_10 : f32 to vector<8x64xf32>
    %11 = arith.maximumf %9, %10 : vector<8x64xf32>
    %c0_11 = arith.constant 0 : index
    %c0_12 = arith.constant 0 : index
    %12 = vector.load %arg6[%c0_11, %c0_12] : memref<8x64xf32, #tpu.memory_space<vmem>>, vector<8x64xf32>
    tpu.vector_store %arg6[%c0_11, %c0_12], %11 {strides = array<i32>} : memref<8x64xf32, #tpu.memory_space<vmem>>, vector<8x64xf32>,
    return
  }
  func.func @transform_0(%arg0: i32) -> (i32, i32) {
    %c0_i32 = arith.constant 0 : i32
    %c0_i32_0 = arith.constant 0 : i32
    return %arg0, %c0_i32 : i32, i32
  }
  func.func @transform_1(%arg0: i32) -> (i32, i32) {
    %c0_i32 = arith.constant 0 : i32
    %c0_i32_0 = arith.constant 0 : i32
    return %arg0, %c0_i32 : i32, i32
  }
  func.func @transform_2(%arg0: i32) -> (i32, i32) {
    %c0_i32 = arith.constant 0 : i32
    %c0_i32_0 = arith.constant 0 : i32
    %c0_i32_1 = arith.constant 0 : i32
    return %c0_i32, %c0_i32_0 : i32, i32
  }
  func.func @transform_3(%arg0: i32) -> (i32, i32) {
    %c0_i32 = arith.constant 0 : i32
    %c0_i32_0 = arith.constant 0 : i32
    %c0_i32_1 = arith.constant 0 : i32
    return %c0_i32, %c0_i32_0 : i32, i32
  }
  func.func @transform_4(%arg0: i32) -> (i32, i32) {
    %c0_i32 = arith.constant 0 : i32
    %c0_i32_0 = arith.constant 0 : i32
    %c0_i32_1 = arith.constant 0 : i32
    return %c0_i32, %c0_i32_0 : i32, i32
  }
  func.func @transform_5(%arg0: i32) -> (i32, i32) {
    %c0_i32 = arith.constant 0 : i32
    %c0_i32_0 = arith.constant 0 : i32
    return %arg0, %c0_i32 : i32, i32
  }
}

</mosaic_0001>

<llo_original>
// kernel: tpu_custom_call.1
$region0: #{tpu_custom_call.1}
  #allocation0 [shape = 'u32[]', space=smem, size = 0x4, offset = 0x4, fixed_abs, tag = 'smem constant byte address 0x4 - core index']
  #allocation1 [shape = 'u32[144,128]{1,0:T(1,128)}', space=vmem, size = 0x12000, scoped, tag = 'internal scratch']
  %s0 = inlined_call_operand.hbm [shape: f32[8,32], index: 0, kind: input, shape index: {}]
  %s1 = inlined_call_operand.hbm [shape: f32[8,32], index: 1, kind: input, shape index: {}]
  %s2 = inlined_call_operand.hbm [shape: f32[32,64], index: 2, kind: input, shape index: {}]
  %s3 = inlined_call_operand.hbm [shape: f32[32,64], index: 3, kind: input, shape index: {}]
  %s4 = inlined_call_operand.vmem [shape: f32[1,64], index: 4, kind: input, shape index: {}]
  %s5 = inlined_call_operand.hbm [shape: f32[8,64], index: 5, kind: output, shape index: {}]
  %s6 = sld [smem:[#allocation0]]
  $region46: #{tpu_custom_call.1} parent=0
    _
  %s8 = ssub.s32 1, %s6
  %s9 = scalar_select 0, %s8, %s6
  $region1: #{tpu_custom_call.1} parent=0
    #allocation2 [shape = 'u8[4096]{0}', space=vmem, size = 0x1000, scoped, tag = 'input window, operand 0, single buffered']
    #allocation3 [shape = 's32[1]{0}', space=sflag, size = 0x4, scoped, tag = 'scoped memory for tpu_custom_call.1']
    #allocation4 [shape = 's32[1]{0}', space=sflag, size = 0x4, scoped, tag = 'scoped memory for tpu_custom_call.1']
    #allocation5 [shape = 'u8[4096]{0}', space=vmem, size = 0x1000, scoped, tag = 'input window, operand 1, single buffered']
    #allocation6 [shape = 's32[1]{0}', space=sflag, size = 0x4, scoped, tag = 'scoped memory for tpu_custom_call.1']
    #allocation7 [shape = 'u8[16384]{0}', space=vmem, size = 0x4000, scoped, tag = 'input window, operand 2, single buffered']
    #allocation8 [shape = 'u8[16384]{0}', space=vmem, size = 0x4000, scoped, tag = 'input window, operand 3, single buffered']
    #allocation9 [shape = 's32[1]{0}', space=sflag, size = 0x4, scoped, tag = 'scoped memory for tpu_custom_call.1']
    #allocation10 [shape = 'u8[4096]{0}', space=vmem, size = 0x1000, scoped, tag = 'output window, operand 0, single buffered']
    %10 = vsyncpa [#allocation3], 0
    %11 = vsyncpa [#allocation6], 0
    %12 = vsyncpa [#allocation9], 0
    %13 = vsyncpa [#allocation4], 0
    // Predicated region
    $region2: #{tpu_custom_call.1} parent=1 // pred_check
      _
    $region3: #{tpu_custom_call.1} parent=1 // pred_check_branch
      %15 = sbr.rel (0) target = $region5
    $region4: #{tpu_custom_call.1} parent=1 // pred_region
      %s17 = ssub.s32 128, 128
      %18 = vsyncadd [#allocation3], %s17
      %s20 = sshll.u32 [#allocation2], 4
      %s21 = int_to_ptr.vmem [resolvable:$true] %s20
      %23 = dma.hbm_to_vmem [thread:$0]  %s0, 128, %s21, [#allocation3]
    $region5: #{tpu_custom_call.1} parent=1 // pred_fallthru
      _
    // Predicated region
    $region6: #{tpu_custom_call.1} parent=1 // pred_check
      _
    $region7: #{tpu_custom_call.1} parent=1 // pred_check_branch
      %25 = sbr.rel (0) target = $region9
    $region8: #{tpu_custom_call.1} parent=1 // pred_region
      %s27 = ssub.s32 128, 128
      %28 = vsyncadd [#allocation6], %s27
      %s30 = sshll.u32 [#allocation5], 4
      %s31 = int_to_ptr.vmem [resolvable:$true] %s30
      %33 = dma.hbm_to_vmem [thread:$0]  %s1, 128, %s31, [#allocation6]
    $region9: #{tpu_custom_call.1} parent=1 // pred_fallthru
      _
    // Predicated region
    $region10: #{tpu_custom_call.1} parent=1 // pred_check
      _
    $region11: #{tpu_custom_call.1} parent=1 // pred_check_branch
      %35 = sbr.rel (0) target = $region13
    $region12: #{tpu_custom_call.1} parent=1 // pred_region
      %s37 = ssub.s32 512, 512
      %38 = vsyncadd [#allocation6], %s37
      %s39 = sshll.u32 [#allocation7], 4
      %s40 = int_to_ptr.vmem [resolvable:$true] %s39
      %45 = dma.hbm_to_vmem [thread:$0]  %s2, 512, %s40, [#allocation6], 128, 128, 8
    $region13: #{tpu_custom_call.1} parent=1 // pred_fallthru
      _
    // Predicated region
    $region14: #{tpu_custom_call.1} parent=1 // pred_check
      _
    $region15: #{tpu_custom_call.1} parent=1 // pred_check_branch
      %47 = sbr.rel (0) target = $region17
    $region16: #{tpu_custom_call.1} parent=1 // pred_region
      %s49 = ssub.s32 512, 512
      %50 = vsyncadd [#allocation9], %s49
      %s51 = sshll.u32 [#allocation8], 4
      %s52 = int_to_ptr.vmem [resolvable:$true] %s51
      %57 = dma.hbm_to_vmem [thread:$0]  %s3, 512, %s52, [#allocation9], 128, 128, 8
    $region17: #{tpu_custom_call.1} parent=1 // pred_fallthru
      _
    // Predicated region
    $region18: #{tpu_custom_call.1} parent=1 // pred_check
      _
    $region19: #{tpu_custom_call.1} parent=1 // pred_check_branch
      %59 = sbr.rel (0) target = $region21
    $region20: #{tpu_custom_call.1} parent=1 // pred_region
      _
    $region21: #{tpu_custom_call.1} parent=1 // pred_fallthru
      _
    // Predicated region
    $region22: #{tpu_custom_call.1} parent=1 // pred_check
      _
    $region23: #{tpu_custom_call.1} parent=1 // pred_check_branch
      %61 = sbr.rel (0) target = $region25
    $region24: #{tpu_custom_call.1} parent=1 // pred_region
      %62 = dma.done [#allocation3], 128
    $region25: #{tpu_custom_call.1} parent=1 // pred_fallthru
      _
    // Predicated region
    $region26: #{tpu_custom_call.1} parent=1 // pred_check
      _
    $region27: #{tpu_custom_call.1} parent=1 // pred_check_branch
      %64 = sbr.rel (0) target = $region29
    $region28: #{tpu_custom_call.1} parent=1 // pred_region
      %65 = dma.done [#allocation6], 128
    $region29: #{tpu_custom_call.1} parent=1 // pred_fallthru
      _
    // Predicated region
    $region30: #{tpu_custom_call.1} parent=1 // pred_check
      _
    $region31: #{tpu_custom_call.1} parent=1 // pred_check_branch
      %67 = sbr.rel (0) target = $region33
    $region32: #{tpu_custom_call.1} parent=1 // pred_region
      %68 = dma.done [#allocation6], 512
    $region33: #{tpu_custom_call.1} parent=1 // pred_fallthru
      _
    // Predicated region
    $region34: #{tpu_custom_call.1} parent=1 // pred_check
      _
    $region35: #{tpu_custom_call.1} parent=1 // pred_check_branch
      %70 = sbr.rel (0) target = $region37
    $region36: #{tpu_custom_call.1} parent=1 // pred_region
      %71 = dma.done [#allocation9], 512
    $region37: #{tpu_custom_call.1} parent=1 // pred_fallthru
      _
    %v72 = vld [vmem:[#allocation2] sm:$0xff]
    %v73 = vld [vmem:[#allocation7] sm:$0xff]
    %v74 = vld [vmem:[#allocation7 + $0x8] sm:$0xff]
    %v75 = vld [vmem:[#allocation7 + $0x10] sm:$0xff]
    %v76 = vld [vmem:[#allocation7 + $0x18] sm:$0xff]
    %v77 = vld [vmem:[#allocation5] sm:$0xff]
    %v78 = vld [vmem:[#allocation8] sm:$0xff]
    %v79 = vld [vmem:[#allocation8 + $0x8] sm:$0xff]
    %v80 = vld [vmem:[#allocation8 + $0x10] sm:$0xff]
    %v81 = vld [vmem:[#allocation8 + $0x18] sm:$0xff]
    %vm82 = vcmask 261120
    %v84 = vsel %vm82, %v77, 0
    %86 = vmatprep.subr.mxu0 0.0
    %87 = vmatpush1.msra.mxu0 %v78
    %88 = vmatprep.subr.mxu0 0.0
    %89 = vmatpush1.msra.mxu0 %v79
    %90 = vmatprep.subr.mxu0 0.0
    %91 = vmatpush1.msra.mxu0 %v80
    %92 = vmatprep.subr.mxu0 0.0
    %93 = vmatpush1.msra.mxu0 %v81
    %94 = vmatprep.subr.mxu0 0.0
    %95 = vmatpush1.msra.mxu0 0.0
    %96 = vmatprep.subr.mxu0 0.0
    %97 = vmatpush1.msra.mxu0 0.0
    %98 = vmatprep.subr.mxu0 0.0
    %99 = vmatpush1.msra.mxu0 0.0
    %100 = vmatprep.subr.mxu0 0.0
    %101 = vmatpush1.msra.mxu0 0.0
    %102 = vmatprep.subr.mxu0 0.0
    %103 = vmatpush1.msra.mxu0 0.0
    %104 = vmatprep.subr.mxu0 0.0
    %105 = vmatpush1.msra.mxu0 0.0
    %106 = vmatprep.subr.mxu0 0.0
    %107 = vmatpush1.msra.mxu0 0.0
    %108 = vmatprep.subr.mxu0 0.0
    %109 = vmatpush1.msra.mxu0 0.0
    %110 = vmatprep.subr.mxu0 0.0
    %111 = vmatpush1.msra.mxu0 0.0
    %112 = vmatprep.subr.mxu0 0.0
    %113 = vmatpush1.msra.mxu0 0.0
    %114 = vmatprep.subr.mxu0 0.0
    %115 = vmatpush1.msra.mxu0 0.0
    %116 = vmatprep.subr.mxu0 0.0
    %117 = vmatpush1.msra.mxu0 0.0
    %118 = vmatprep.subr.mxu0 0.0
    %119 = vmatpush1.msra.mxu0 0.0
    %120 = vmatprep.subr.mxu0 0.0
    %121 = vmatpush1.msra.mxu0 0.0
    %122 = vmatprep.subr.mxu0 0.0
    %123 = vmatpush1.msra.mxu0 0.0
    %124 = vmatprep.subr.mxu0 0.0
    %125 = vmatpush1.msra.mxu0 0.0
    %126 = vmatprep.subr.mxu0 0.0
    %127 = vmatpush1.msra.mxu0 0.0
    %128 = vmatprep.subr.mxu0 0.0
    %129 = vmatpush1.msra.mxu0 0.0
    %130 = vmatprep.subr.mxu0 0.0
    %131 = vmatpush1.msra.mxu0 0.0
    %132 = vmatprep.subr.mxu0 0.0
    %133 = vmatpush1.msra.mxu0 0.0
    %134 = vmatprep.subr.mxu0 0.0
    %135 = vmatpush1.msra.mxu0 0.0
    %136 = vmatprep.subr.mxu0 0.0
    %137 = vmatpush1.msra.mxu0 0.0
    %138 = vmatprep.subr.mxu0 0.0
    %139 = vmatpush1.msra.mxu0 0.0
    %140 = vmatprep.subr.mxu0 0.0
    %141 = vmatpush1.msra.mxu0 0.0
    %142 = vmatprep.subr.mxu0 0.0
    %143 = vmatpush1.msra.mxu0 0.0
    %144 = vmatprep.subr.mxu0 0.0
    %145 = vmatpush1.msra.mxu0 0.0
    %146 = vmatprep.subr.mxu0 0.0
    %147 = vmatpush1.msra.mxu0 0.0
    %148 = vmatprep.subr.mxu0 0.0
    %149 = vmatpush1.msra.mxu0 0.0
    %150 = vmatprep.mubr.f32.mxu0 0.0
    %151 = vmatmul.mubr.f32.gmra.mrb[0].mxu0 %v84
    %v152 = vpop.f32.mrb[0].mxu0
    %v153 = vadd.f32 0.0, %v152
    %v154 = vpop.f32.mrb[0].mxu0
    %155 = vdwg.mxu0
    %v157 = vsel %vm82, %v72, 0
    %159 = vmatprep.subr.mxu0 0.0
    %160 = vmatpush1.msra.mxu0 %v73
    %161 = vmatprep.subr.mxu0 0.0
    %162 = vmatpush1.msra.mxu0 %v74
    %163 = vmatprep.subr.mxu0 0.0
    %164 = vmatpush1.msra.mxu0 %v75
    %165 = vmatprep.subr.mxu0 0.0
    %166 = vmatpush1.msra.mxu0 %v76
    %167 = vmatprep.subr.mxu0 0.0
    %168 = vmatpush1.msra.mxu0 0.0
    %169 = vmatprep.subr.mxu0 0.0
    %170 = vmatpush1.msra.mxu0 0.0
    %171 = vmatprep.subr.mxu0 0.0
    %172 = vmatpush1.msra.mxu0 0.0
    %173 = vmatprep.subr.mxu0 0.0
    %174 = vmatpush1.msra.mxu0 0.0
    %175 = vmatprep.subr.mxu0 0.0
    %176 = vmatpush1.msra.mxu0 0.0
    %177 = vmatprep.subr.mxu0 0.0
    %178 = vmatpush1.msra.mxu0 0.0
    %179 = vmatprep.subr.mxu0 0.0
    %180 = vmatpush1.msra.mxu0 0.0
    %181 = vmatprep.subr.mxu0 0.0
    %182 = vmatpush1.msra.mxu0 0.0
    %183 = vmatprep.subr.mxu0 0.0
    %184 = vmatpush1.msra.mxu0 0.0
    %185 = vmatprep.subr.mxu0 0.0
    %186 = vmatpush1.msra.mxu0 0.0
    %187 = vmatprep.subr.mxu0 0.0
    %188 = vmatpush1.msra.mxu0 0.0
    %189 = vmatprep.subr.mxu0 0.0
    %190 = vmatpush1.msra.mxu0 0.0
    %191 = vmatprep.subr.mxu0 0.0
    %192 = vmatpush1.msra.mxu0 0.0
    %193 = vmatprep.subr.mxu0 0.0
    %194 = vmatpush1.msra.mxu0 0.0
    %195 = vmatprep.subr.mxu0 0.0
    %196 = vmatpush1.msra.mxu0 0.0
    %197 = vmatprep.subr.mxu0 0.0
    %198 = vmatpush1.msra.mxu0 0.0
    %199 = vmatprep.subr.mxu0 0.0
    %200 = vmatpush1.msra.mxu0 0.0
    %201 = vmatprep.subr.mxu0 0.0
    %202 = vmatpush1.msra.mxu0 0.0
    %203 = vmatprep.subr.mxu0 0.0
    %204 = vmatpush1.msra.mxu0 0.0
    %205 = vmatprep.subr.mxu0 0.0
    %206 = vmatpush1.msra.mxu0 0.0
    %207 = vmatprep.subr.mxu0 0.0
    %208 = vmatpush1.msra.mxu0 0.0
    %209 = vmatprep.subr.mxu0 0.0
    %210 = vmatpush1.msra.mxu0 0.0
    %211 = vmatprep.subr.mxu0 0.0
    %212 = vmatpush1.msra.mxu0 0.0
    %213 = vmatprep.subr.mxu0 0.0
    %214 = vmatpush1.msra.mxu0 0.0
    %215 = vmatprep.subr.mxu0 0.0
    %216 = vmatpush1.msra.mxu0 0.0
    %217 = vmatprep.subr.mxu0 0.0
    %218 = vmatpush1.msra.mxu0 0.0
    %219 = vmatprep.subr.mxu0 0.0
    %220 = vmatpush1.msra.mxu0 0.0
    %221 = vmatprep.subr.mxu0 0.0
    %222 = vmatpush1.msra.mxu0 0.0
    %223 = vmatprep.mubr.f32.mxu0 0.0
    %224 = vmatmul.mubr.f32.gmra.mrb[0].mxu0 %v157
    %v225 = vpop.f32.mrb[0].mxu0
    %v226 = vadd.f32 %v153, %v225
    %v227 = vpop.f32.mrb[0].mxu0
    %228 = vdwg.mxu0
    %v229 = vld [vmem:[%s4] sm:$0x1]
    %v231 = vlaneseq
    %v232 = vshrl.u32 %v231, 7
    %v233 = vsub.s32 0, %v232
    %v234 = vrot.slane %v229, %v233
    %v236 = vadd.f32 %v226, %v234
    %v237 = vmax.f32 %v236, 0.0
    %vm238 = vcmask 523264
    %239 = vst.msk [vmem:[#allocation10] sm:$0xff] %vm238, %v237
    // Predicated region
    $region38: #{tpu_custom_call.1} parent=1 // pred_check
      _
    $region39: #{tpu_custom_call.1} parent=1 // pred_check_branch
      %241 = sbr.rel (0) target = $region41
    $region40: #{tpu_custom_call.1} parent=1 // pred_region
      %s243 = ssub.s32 128, 128
      %244 = vsyncadd [#allocation4], %s243
      %s246 = sshll.u32 [#allocation10], 4
      %s247 = int_to_ptr.vmem [resolvable:$true] %s246
      %249 = dma.vmem_to_hbm [thread:$0]  %s247, 128, %s5, [#allocation4]
    $region41: #{tpu_custom_call.1} parent=1 // pred_fallthru
      _
    // Predicated region
    $region42: #{tpu_custom_call.1} parent=1 // pred_check
      _
    $region43: #{tpu_custom_call.1} parent=1 // pred_check_branch
      %251 = sbr.rel (0) target = $region45
    $region44: #{tpu_custom_call.1} parent=1 // pred_region
      %252 = dma.done [#allocation4], 128
    $region45: #{tpu_custom_call.1} parent=1 // pred_fallthru
      _
    %253 = vsyncpa [#allocation3], 1
    %254 = vsyncpa [#allocation6], 1
    %255 = vsyncpa [#allocation9], 1
    %256 = vsyncpa [#allocation4], 1

</llo_original>
